<compile_context>
chip_gen: v6e
topology: v6e:2x2x1
jax: 0.10.0
libtpu: 0.0.40
codegen_flags: <defaults>
</compile_context>

<pallas_src>
import jax
import jax.numpy as jnp
from jax.experimental import pallas as pl
from jax.experimental.pallas import tpu as pltpu


def _identity_kernel(src_ref, o_ref):
    # Pure passthrough of the predefined-outputs tile.
    o_ref[...] = src_ref[...]


_LANES = 128
# Per pipeline buffer. With double-buffered input + output (4 buffers) this is
# 8 MiB, safely inside v5e's 16 MiB scoped-VMEM default and v6e/v7x's 32 MiB.
_TILE_BYTES = 2 * 1024 * 1024


def dummy_model_forward(outputs: jax.Array, *args, **kwargs) -> jax.Array:
    """Pallas identity materialization of DummyModel's stored `outputs`.

    All args/kwargs are ignored, matching the PyTorch module.
    """
    if outputs is None:
        return None

    orig_shape = outputs.shape
    dtype = outputs.dtype
    n = int(outputs.size)
    if n == 0:
        # Nothing to move; returning the (empty) stored tensor is exact.
        return outputs

    itemsize = jnp.dtype(dtype).itemsize

    # ---- lane-dense 2-D view, with NO host-side pad in the common case -----
    host_padded = False
    if n % _LANES == 0:
        rows, lanes = n // _LANES, _LANES
        flat2d = outputs.reshape(rows, lanes)
    elif n * itemsize <= _TILE_BYTES:
        # Small ragged tensor: single full-extent block (exempt from the
        # (8,128) rule); masked stores are negligible at this size.
        rows, lanes = 1, n
        flat2d = outputs.reshape(rows, lanes)
    else:
        # Rare: large and not 128-divisible. Pad once, slice back afterwards.
        rows, lanes = pl.cdiv(n, _LANES), _LANES
        flat2d = jnp.pad(outputs.reshape(-1), (0, rows * lanes - n))
        flat2d = flat2d.reshape(rows, lanes)
        host_padded = True

    # ---- row tile: multiple of the packed-sublane quantum ------------------
    sub = 8 * max(1, 4 // itemsize)           # f32: 8, bf16: 16, int8/fp8: 32
    tile_r = max(sub, (_TILE_BYTES // (lanes * itemsize)) // sub * sub)

    if rows <= tile_r or lanes != _LANES:
        # Small / fast path: one full-extent block, no grid bookkeeping.
        tile_r = rows
        num_tiles = 1
    else:
        # Ragged trailing tile is handled by Pallas boundary masking; for an
        # identity copy the out-of-bounds part of the block is never written
        # back, so no host-side padding is needed.
        num_tiles = pl.cdiv(rows, tile_r)

    out2d = pl.pallas_call(
        _identity_kernel,
        out_shape=jax.ShapeDtypeStruct((rows, lanes), dtype),
        grid=(num_tiles,),
        in_specs=[pl.BlockSpec((tile_r, lanes), lambda i: (i, 0))],
        out_specs=pl.BlockSpec((tile_r, lanes), lambda i: (i, 0)),
        # NOTE: no input_output_aliases -- aliasing would donate (or force a
        # defensive copy of) the stored `self.outputs` buffer (review item).
        compiler_params=pltpu.CompilerParams(
            dimension_semantics=("parallel",)),
        cost_estimate=pl.CostEstimate(
            flops=0,
            transcendentals=0,
            bytes_accessed=2 * rows * lanes * itemsize),
    )(flat2d)

    out = out2d
    if host_padded:
        out = out.reshape(-1)[:n]
    return out.reshape(orig_shape)


class DummyModel:
    """JAX/Pallas mirror of the PyTorch DummyModel."""

    def __init__(self, outputs=None, *args, use_pallas_kernel=True, **kwargs):
        self.outputs = outputs
        # use_pallas_kernel=False is the review's #1 optimization: return the
        # stored tensor directly, zero bytes moved.
        self.use_pallas_kernel = use_pallas_kernel

    def forward(self, *args, **kwargs):
        if self.outputs is None:
            return None
        if not self.use_pallas_kernel or not isinstance(self.outputs, jax.Array):
            # Zero-copy passthrough: exact PyTorch semantics, no data movement.
            return self.outputs
        return dummy_model_forward(self.outputs, *args, **kwargs)

    def __call__(self, *args, **kwargs):
        return self.forward(*args, **kwargs)


if __name__ == "__main__":
    key = jax.random.PRNGKey(0)
    k_out, k_in = jax.random.split(key)

    # Predefined outputs (what DummyModel.__init__ receives), NCHW layout.
    predefined_outputs = jax.random.normal(
        k_out, (2, 4, 16, 16), dtype=jnp.float32)

    # A dummy input -- the module ignores it entirely.
    x = jax.random.normal(k_in, (2, 4, 16, 16), dtype=jnp.float32)

    model = DummyModel(outputs=predefined_outputs)   # kernel path enabled
    result = jax.block_until_ready(model(x))

    assert result.shape == predefined_outputs.shape
    assert result.dtype == predefined_outputs.dtype
    assert bool(jnp.array_equal(result, predefined_outputs)), \
        "outputs must pass through unchanged"

    # Second call must also succeed (no donated / invalidated buffers).
    result2 = jax.block_until_ready(model(x))
    assert bool(jnp.array_equal(result2, predefined_outputs))

    print("KERNEL_OK")
</pallas_src>

<mosaic_0001>
module attributes {stable_mosaic.version = 11 : i64} {
  func.func @_identity_kernel(%arg0: i32, %arg1: memref<16x128xf32, #tpu.memory_space<vmem>>, %arg2: memref<16x128xf32, #tpu.memory_space<vmem>>) attributes {dimension_semantics = [#tpu.dimension_semantics<parallel>], iteration_bounds = array<i64: 1>, scalar_prefetch = 0 : i64, scratch_operands = 0 : i64, tpu.core_type = #tpu.core_type<tc>, window_params = [{transform_indices = @transform_0, window_bounds = array<i64: 16, 128>}, {transform_indices = @transform_1, window_bounds = array<i64: 16, 128>}]} {
    %c0 = arith.constant 0 : index
    %c0_0 = arith.constant 0 : index
    %0 = vector.load %arg1[%c0, %c0_0] : memref<16x128xf32, #tpu.memory_space<vmem>>, vector<16x128xf32>
    %c0_1 = arith.constant 0 : index
    %c0_2 = arith.constant 0 : index
    %1 = vector.load %arg2[%c0_1, %c0_2] : memref<16x128xf32, #tpu.memory_space<vmem>>, vector<16x128xf32>
    tpu.vector_store %arg2[%c0_1, %c0_2], %0 {strides = array<i32>} : memref<16x128xf32, #tpu.memory_space<vmem>>, vector<16x128xf32>,
    return
  }
  func.func @transform_0(%arg0: i32) -> (i32, i32) {
    %c0_i32 = arith.constant 0 : i32
    %c0_i32_0 = arith.constant 0 : i32
    return %arg0, %c0_i32 : i32, i32
  }
  func.func @transform_1(%arg0: i32) -> (i32, i32) {
    %c0_i32 = arith.constant 0 : i32
    %c0_i32_0 = arith.constant 0 : i32
    return %arg0, %c0_i32 : i32, i32
  }
}

</mosaic_0001>

<llo_original>
// kernel: tpu_custom_call.1
$region0: #{tpu_custom_call.1}
  #allocation0 [shape = 'u32[]', space=smem, size = 0x4, offset = 0x4, fixed_abs, tag = 'smem constant byte address 0x4 - core index']
  #allocation1 [shape = 'u32[144,128]{1,0:T(1,128)}', space=vmem, size = 0x12000, scoped, tag = 'internal scratch']
  %s0 = inlined_call_operand.hbm [shape: f32[16,128], index: 0, kind: input, shape index: {}]
  %s1 = inlined_call_operand.hbm [shape: f32[16,128], index: 1, kind: output, shape index: {}]
  %s2 = sld [smem:[#allocation0]]
  $region18: #{tpu_custom_call.1} parent=0
    _
  %s4 = ssub.s32 1, %s2
  %s5 = scalar_select 0, %s4, %s2
  $region1: #{tpu_custom_call.1} parent=0
    #allocation2 [shape = 'u8[8192]{0}', space=vmem, size = 0x2000, scoped, tag = 'input window, operand 0, single buffered']
    #allocation3 [shape = 's32[1]{0}', space=sflag, size = 0x4, scoped, tag = 'scoped memory for tpu_custom_call.1']
    #allocation4 [shape = 's32[1]{0}', space=sflag, size = 0x4, scoped, tag = 'scoped memory for tpu_custom_call.1']
    #allocation5 [shape = 'u8[8192]{0}', space=vmem, size = 0x2000, scoped, tag = 'output window, operand 0, single buffered']
    %6 = vsyncpa [#allocation3], 0
    %7 = vsyncpa [#allocation4], 0
    // Predicated region
    $region2: #{tpu_custom_call.1} parent=1 // pred_check
      _
    $region3: #{tpu_custom_call.1} parent=1 // pred_check_branch
      %9 = sbr.rel (0) target = $region5
    $region4: #{tpu_custom_call.1} parent=1 // pred_region
      %s11 = ssub.s32 256, 256
      %12 = vsyncadd [#allocation3], %s11
      %s13 = sshll.u32 [#allocation2], 4
      %s14 = int_to_ptr.vmem [resolvable:$true] %s13
      %19 = dma.hbm_to_vmem [thread:$0]  %s0, 256, %s14, [#allocation3], 128, 128, 8
    $region5: #{tpu_custom_call.1} parent=1 // pred_fallthru
      _
    // Predicated region
    $region6: #{tpu_custom_call.1} parent=1 // pred_check
      _
    $region7: #{tpu_custom_call.1} parent=1 // pred_check_branch
      %21 = sbr.rel (0) target = $region9
    $region8: #{tpu_custom_call.1} parent=1 // pred_region
      %22 = dma.done [#allocation3], 256
    $region9: #{tpu_custom_call.1} parent=1 // pred_fallthru
      _
    %v23 = vld [vmem:[#allocation2] sm:$0xff]
    %v24 = vld [vmem:[#allocation2 + $0x8] sm:$0xff]
    %25 = vst [vmem:[#allocation5] sm:$0xff] %v23
    %26 = vst [vmem:[#allocation5 + $0x8] sm:$0xff] %v24
    // Predicated region
    $region10: #{tpu_custom_call.1} parent=1 // pred_check
      _
    $region11: #{tpu_custom_call.1} parent=1 // pred_check_branch
      %28 = sbr.rel (0) target = $region13
    $region12: #{tpu_custom_call.1} parent=1 // pred_region
      %s30 = ssub.s32 256, 256
      %31 = vsyncadd [#allocation4], %s30
      %s32 = sshll.u32 [#allocation5], 4
      %s33 = int_to_ptr.vmem [resolvable:$true] %s32
      %38 = dma.vmem_to_hbm [thread:$0]  %s33, 256, %s1, [#allocation4], 128, 128, 8
    $region13: #{tpu_custom_call.1} parent=1 // pred_fallthru
      _
    // Predicated region
    $region14: #{tpu_custom_call.1} parent=1 // pred_check
      _
    $region15: #{tpu_custom_call.1} parent=1 // pred_check_branch
      %40 = sbr.rel (0) target = $region17
    $region16: #{tpu_custom_call.1} parent=1 // pred_region
      %41 = dma.done [#allocation4], 256
    $region17: #{tpu_custom_call.1} parent=1 // pred_fallthru
      _
    %42 = vsyncpa [#allocation3], 1
    %43 = vsyncpa [#allocation4], 1

</llo_original>
